<compile_context>
chip_gen: v7x
topology: tpu7x:2x2x1
jax: 0.10.0
libtpu: 0.0.40
codegen_flags: <defaults>
</compile_context>

<pallas_src>
import functools
import math

import jax
import jax.numpy as jnp
from jax import lax
from jax.experimental import pallas as pl
from jax.experimental.pallas import tpu as pltpu

_LANES = 128
_SQRT_2_OVER_PI = math.sqrt(2.0 / math.pi)
_INV_SQRT_2 = 1.0 / math.sqrt(2.0)


def _gelu_exact(x):
    # PyTorch nn.GELU() default = exact (erf-based) GELU. lax.erf lowers to a
    # long VALU polynomial on TPU -> only use when exact numerics are required.
    return 0.5 * x * (1.0 + lax.erf(x * _INV_SQRT_2))


def _gelu_tanh(x):
    # PyTorch nn.GELU(approximate='tanh') / jax.nn.gelu(approximate=True).
    # tanh maps to the EUP, whose bundle slot is otherwise idle in this kernel.
    return 0.5 * x * (1.0 + jnp.tanh(_SQRT_2_OVER_PI * (x + 0.044715 * (x * x * x))))


def _mlp_kernel(x_ref, w1_ref, b1_ref, w2_ref, b2_ref, w3_ref, b3_ref, o_ref,
                *, approximate_gelu):
    """One batch tile.

    x_ref arrives in natural [bb, D] layout straight from HBM (no wrapper-side
    pad/transpose passes). The first matmul contracts the feature axis of both
    operands so activations land lane-dense [H, bb] with batch on the 128-lane
    axis -> fully populated vregs for the GELUs and a full unmasked output vst.
    """
    act = _gelu_tanh if approximate_gelu else _gelu_exact

    h1 = lax.dot_general(                       # [H1, bb]
        w1_ref[...], x_ref[...],
        dimension_numbers=(((1,), (1,)), ((), ())),
        preferred_element_type=jnp.float32)
    h1 = act(h1 + b1_ref[...])

    h2 = jnp.dot(w2_ref[...], h1, preferred_element_type=jnp.float32)  # [H2, bb]
    h2 = act(h2 + b2_ref[...])

    # Final Linear(H2 -> 1): VPU multiply + cross-sublane (XLU) reduce gives a
    # lane-dense [1, bb] slab instead of a 1-column MXU matmul.
    out = jnp.sum(h2 * w3_ref[...], axis=0, keepdims=True) + b3_ref[0]
    o_ref[...] = out.astype(o_ref.dtype)
    # TODO(synk): if bundle dumps show ld/st slot_util > 50% at large bb,
    # register-block the batch tile (256-lane chunks, lax.fori_loop unroll=True)
    # so h1/h2 stay in vregs instead of round-tripping through VMEM.


def _round_up(n: int, m: int) -> int:
    return ((n + m - 1) // m) * m


@functools.partial(jax.jit, static_argnames=("block_b", "approximate_gelu"))
def regression_network_forward(x, w1, b1, w2, b2, w3, b3, *,
                               block_b=8192, approximate_gelu=True):
    """Forward pass of RegressionNetwork.

    PyTorch nn.Linear parameter layout:
      x  : [B, D]
      w1 : [H1, D],  b1 : [H1]
      w2 : [H2, H1], b2 : [H2]
      w3 : [1, H2],  b3 : [1]
    Returns [B, 1] float32.

    approximate_gelu=False reproduces PyTorch nn.GELU()'s exact-erf numerics;
    the default True uses the tanh approximation (EUP) for speed.
    """
    B, D = x.shape
    H1 = w1.shape[0]
    H2 = w2.shape[0]

    if B >= _LANES:
        # Big tiles amortize the ~0.35 us per-grid-step overhead. Even at
        # bb=8192 the x tile is only 512 KiB (1 MiB double-buffered), far under
        # every generation's scoped-VMEM default, so no vmem_limit override.
        bb = min(_round_up(block_b, _LANES), (B // _LANES) * _LANES)
        if B >= 2 * _LANES:
            # v7x megacore: keep >= 2 steps on the "parallel" axis so both
            # TensorCores get a tile (harmless on single-TC v5e/v6e).
            bb = min(bb, _round_up(pl.cdiv(B, 2), _LANES))
    else:
        bb = B  # single narrow tile; full-dim blocks satisfy the (8,128) rule

    grid = (pl.cdiv(B, bb),)  # ragged tail handled by Pallas (OOB writes dropped)

    kernel = functools.partial(_mlp_kernel, approximate_gelu=approximate_gelu)

    out = pl.pallas_call(
        kernel,
        out_shape=jax.ShapeDtypeStruct((1, B), jnp.float32),
        grid=grid,
        in_specs=[
            pl.BlockSpec((bb, D), lambda i: (i, 0)),      # x tile, natural layout
            pl.BlockSpec((H1, D), lambda i: (0, 0)),      # W1 (resident)
            pl.BlockSpec((H1, 1), lambda i: (0, 0)),      # b1 column
            pl.BlockSpec((H2, H1), lambda i: (0, 0)),     # W2 (resident)
            pl.BlockSpec((H2, 1), lambda i: (0, 0)),      # b2 column
            pl.BlockSpec((H2, 1), lambda i: (0, 0)),      # w3 column
            pl.BlockSpec(memory_space=pltpu.MemorySpace.SMEM),  # b3 scalar in SMEM
        ],
        out_specs=pl.BlockSpec((1, bb), lambda i: (0, i)),  # lane-dense output slab
        compiler_params=pltpu.CompilerParams(
            dimension_semantics=("parallel",),
        ),
    )(
        x,
        w1,
        b1.reshape(H1, 1),
        w2,
        b2.reshape(H2, 1),
        w3.reshape(H2, 1),   # [1, H2] -> [H2, 1] (same data order, free)
        b3.reshape(1),
    )

    # (1, B) -> (B, 1) is a pure reshape: same row-major data, no transpose pass.
    return out.reshape(B, 1)


def _init_linear(key, fan_in, fan_out):
    # Deterministic init mimicking nn.Linear's U(-1/sqrt(fan_in), 1/sqrt(fan_in)),
    # weights stored in PyTorch layout [out, in].
    kw, kb = jax.random.split(key)
    bound = 1.0 / math.sqrt(fan_in)
    w = jax.random.uniform(kw, (fan_out, fan_in), jnp.float32, -bound, bound)
    b = jax.random.uniform(kb, (fan_out,), jnp.float32, -bound, bound)
    return w, b


def _reference_forward(x, w1, b1, w2, b2, w3, b3, *, approximate):
    h1 = jax.nn.gelu(x @ w1.T + b1, approximate=approximate)
    h2 = jax.nn.gelu(h1 @ w2.T + b2, approximate=approximate)
    return h2 @ w3.T + b3


if __name__ == "__main__":
    input_dim, hidden_1_dim, hidden_2_dim, output_dim = 16, 32, 32, 1
    batch = 200  # not a multiple of the tile / lane width -> exercises ragged tail

    key = jax.random.PRNGKey(0)
    kx, k1, k2, k3 = jax.random.split(key, 4)

    x = jax.random.normal(kx, (batch, input_dim), jnp.float32)
    w1, b1 = _init_linear(k1, input_dim, hidden_1_dim)
    w2, b2 = _init_linear(k2, hidden_1_dim, hidden_2_dim)
    w3, b3 = _init_linear(k3, hidden_2_dim, output_dim)

    # Exact-erf GELU path: matches PyTorch nn.GELU() default numerics.
    out_exact = regression_network_forward(
        x, w1, b1, w2, b2, w3, b3, approximate_gelu=False)
    out_exact = jax.block_until_ready(out_exact)
    ref_exact = _reference_forward(x, w1, b1, w2, b2, w3, b3, approximate=False)
    assert out_exact.shape == (batch, output_dim)
    assert jnp.allclose(out_exact, ref_exact, atol=1e-4, rtol=1e-4), \
        "mismatch vs exact-GELU reference"

    # Default fast path: tanh-approx GELU on the EUP
    # (matches nn.GELU(approximate='tanh') / jax.nn.gelu(approximate=True)).
    out_tanh = regression_network_forward(x, w1, b1, w2, b2, w3, b3)
    out_tanh = jax.block_until_ready(out_tanh)
    ref_tanh = _reference_forward(x, w1, b1, w2, b2, w3, b3, approximate=True)
    assert out_tanh.shape == (batch, output_dim)
    assert jnp.allclose(out_tanh, ref_tanh, atol=1e-4, rtol=1e-4), \
        "mismatch vs tanh-GELU reference"

    print("KERNEL_OK")
</pallas_src>

<mosaic_0001>
module attributes {stable_mosaic.version = 11 : i64} {
  func.func @_mlp_kernel(%arg0: i32, %arg1: memref<128x16xf32, #tpu.memory_space<vmem>>, %arg2: memref<32x16xf32, #tpu.memory_space<vmem>>, %arg3: memref<32x1xf32, #tpu.memory_space<vmem>>, %arg4: memref<32x32xf32, #tpu.memory_space<vmem>>, %arg5: memref<32x1xf32, #tpu.memory_space<vmem>>, %arg6: memref<32x1xf32, #tpu.memory_space<vmem>>, %arg7: memref<1xf32, #tpu.memory_space<smem>>, %arg8: memref<1x128xf32, #tpu.memory_space<vmem>>) attributes {dimension_semantics = [#tpu.dimension_semantics<parallel>], iteration_bounds = array<i64: 2>, scalar_prefetch = 0 : i64, scratch_operands = 0 : i64, tpu.core_type = #tpu.core_type<tc>, window_params = [{transform_indices = @transform_0, window_bounds = array<i64: 128, 16>}, {pipeline_mode = #tpu.pipeline_mode<synchronous>, transform_indices = @transform_1, window_bounds = array<i64: 32, 16>}, {pipeline_mode = #tpu.pipeline_mode<synchronous>, transform_indices = @transform_2, window_bounds = array<i64: 32, 1>}, {pipeline_mode = #tpu.pipeline_mode<synchronous>, transform_indices = @transform_3, window_bounds = array<i64: 32, 32>}, {pipeline_mode = #tpu.pipeline_mode<synchronous>, transform_indices = @transform_4, window_bounds = array<i64: 32, 1>}, {pipeline_mode = #tpu.pipeline_mode<synchronous>, transform_indices = @transform_5, window_bounds = array<i64: 32, 1>}, {transform_indices = @transform_6, window_bounds = array<i64: 1>}, {transform_indices = @transform_7, window_bounds = array<i64: 1, 128>}]} {
    %c0 = arith.constant 0 : index
    %c0_0 = arith.constant 0 : index
    %0 = vector.load %arg2[%c0, %c0_0] : memref<32x16xf32, #tpu.memory_space<vmem>>, vector<32x16xf32>
    %c0_1 = arith.constant 0 : index
    %c0_2 = arith.constant 0 : index
    %1 = vector.load %arg1[%c0_1, %c0_2] : memref<128x16xf32, #tpu.memory_space<vmem>>, vector<128x16xf32>
    %cst = arith.constant dense<0.000000e+00> : vector<32x128xf32>
    %2 = tpu.matmul %0, %1, %cst {dimension_numbers = #tpu.dot_dimension_numbers<[1], [1], [0], [0], [0, 0, 1, 0], [], []>} : vector<32x16xf32>, vector<128x16xf32>, vector<32x128xf32> -> vector<32x128xf32>
    %c0_3 = arith.constant 0 : index
    %c0_4 = arith.constant 0 : index
    %3 = vector.load %arg3[%c0_3, %c0_4] : memref<32x1xf32, #tpu.memory_space<vmem>>, vector<32x1xf32>
    %4 = vector.broadcast %3 : vector<32x1xf32> to vector<32x128xf32>
    %5 = arith.addf %2, %4 : vector<32x128xf32>
    %cst_5 = arith.constant 5.000000e-01 : f32
    %6 = vector.broadcast %cst_5 : f32 to vector<32x128xf32>
    %7 = arith.mulf %6, %5 : vector<32x128xf32>
    %cst_6 = arith.constant 0.707106769 : f32
    %8 = vector.broadcast %cst_6 : f32 to vector<32x128xf32>
    %9 = arith.mulf %5, %8 : vector<32x128xf32>
    %10 = math.erf %9 : vector<32x128xf32>
    %cst_7 = arith.constant 1.000000e+00 : f32
    %11 = vector.broadcast %cst_7 : f32 to vector<32x128xf32>
    %12 = arith.addf %11, %10 : vector<32x128xf32>
    %13 = arith.mulf %7, %12 : vector<32x128xf32>
    %c0_8 = arith.constant 0 : index
    %c0_9 = arith.constant 0 : index
    %14 = vector.load %arg4[%c0_8, %c0_9] : memref<32x32xf32, #tpu.memory_space<vmem>>, vector<32x32xf32>
    %cst_10 = arith.constant dense<0.000000e+00> : vector<32x128xf32>
    %15 = tpu.matmul %14, %13, %cst_10 {dimension_numbers = #tpu.dot_dimension_numbers<[1], [0], [0], [1], [0, 0, 1, 1], [], []>} : vector<32x32xf32>, vector<32x128xf32>, vector<32x128xf32> -> vector<32x128xf32>
    %c0_11 = arith.constant 0 : index
    %c0_12 = arith.constant 0 : index
    %16 = vector.load %arg5[%c0_11, %c0_12] : memref<32x1xf32, #tpu.memory_space<vmem>>, vector<32x1xf32>
    %17 = vector.broadcast %16 : vector<32x1xf32> to vector<32x128xf32>
    %18 = arith.addf %15, %17 : vector<32x128xf32>
    %cst_13 = arith.constant 5.000000e-01 : f32
    %19 = vector.broadcast %cst_13 : f32 to vector<32x128xf32>
    %20 = arith.mulf %19, %18 : vector<32x128xf32>
    %cst_14 = arith.constant 0.707106769 : f32
    %21 = vector.broadcast %cst_14 : f32 to vector<32x128xf32>
    %22 = arith.mulf %18, %21 : vector<32x128xf32>
    %23 = math.erf %22 : vector<32x128xf32>
    %cst_15 = arith.constant 1.000000e+00 : f32
    %24 = vector.broadcast %cst_15 : f32 to vector<32x128xf32>
    %25 = arith.addf %24, %23 : vector<32x128xf32>
    %26 = arith.mulf %20, %25 : vector<32x128xf32>
    %c0_16 = arith.constant 0 : index
    %c0_17 = arith.constant 0 : index
    %27 = vector.load %arg6[%c0_16, %c0_17] : memref<32x1xf32, #tpu.memory_space<vmem>>, vector<32x1xf32>
    %28 = vector.broadcast %27 : vector<32x1xf32> to vector<32x128xf32>
    %29 = arith.mulf %26, %28 : vector<32x128xf32>
    %cst_18 = arith.constant dense<0.000000e+00> : vector<128xf32>
    %30 = vector.multi_reduction <add>, %29, %cst_18 [0] : vector<32x128xf32> to vector<128xf32>
    %31 = vector.shape_cast %30 : vector<128xf32> to vector<1x128xf32>
    %c0_19 = arith.constant 0 : index
    %32 = memref.load %arg7[%c0_19] : memref<1xf32, #tpu.memory_space<smem>>
    %33 = vector.broadcast %32 : f32 to vector<1x128xf32>
    %34 = arith.addf %31, %33 : vector<1x128xf32>
    %c0_20 = arith.constant 0 : index
    %c0_21 = arith.constant 0 : index
    %35 = vector.load %arg8[%c0_20, %c0_21] : memref<1x128xf32, #tpu.memory_space<vmem>>, vector<1x128xf32>
    tpu.vector_store %arg8[%c0_20, %c0_21], %34 {strides = array<i32>} : memref<1x128xf32, #tpu.memory_space<vmem>>, vector<1x128xf32>,
    return
  }
  func.func @transform_0(%arg0: i32) -> (i32, i32) {
    %c0_i32 = arith.constant 0 : i32
    %c0_i32_0 = arith.constant 0 : i32
    return %arg0, %c0_i32 : i32, i32
  }
  func.func @transform_1(%arg0: i32) -> (i32, i32) {
    %c0_i32 = arith.constant 0 : i32
    %c0_i32_0 = arith.constant 0 : i32
    %c0_i32_1 = arith.constant 0 : i32
    return %c0_i32, %c0_i32_0 : i32, i32
  }
  func.func @transform_2(%arg0: i32) -> (i32, i32) {
    %c0_i32 = arith.constant 0 : i32
    %c0_i32_0 = arith.constant 0 : i32
    %c0_i32_1 = arith.constant 0 : i32
    return %c0_i32, %c0_i32_0 : i32, i32
  }
  func.func @transform_3(%arg0: i32) -> (i32, i32) {
    %c0_i32 = arith.constant 0 : i32
    %c0_i32_0 = arith.constant 0 : i32
    %c0_i32_1 = arith.constant 0 : i32
    return %c0_i32, %c0_i32_0 : i32, i32
  }
  func.func @transform_4(%arg0: i32) -> (i32, i32) {
    %c0_i32 = arith.constant 0 : i32
    %c0_i32_0 = arith.constant 0 : i32
    %c0_i32_1 = arith.constant 0 : i32
    return %c0_i32, %c0_i32_0 : i32, i32
  }
  func.func @transform_5(%arg0: i32) -> (i32, i32) {
    %c0_i32 = arith.constant 0 : i32
    %c0_i32_0 = arith.constant 0 : i32
    %c0_i32_1 = arith.constant 0 : i32
    return %c0_i32, %c0_i32_0 : i32, i32
  }
  func.func @transform_6(%arg0: i32) -> i32 {
    %c0_i32 = arith.constant 0 : i32
    %c0_i32_0 = arith.constant 0 : i32
    return %c0_i32 : i32
  }
  func.func @transform_7(%arg0: i32) -> (i32, i32) {
    %c0_i32 = arith.constant 0 : i32
    %c0_i32_0 = arith.constant 0 : i32
    return %c0_i32, %arg0 : i32, i32
  }
}

</mosaic_0001>

<llo_original>
// kernel: regression_network_forward.1
$region0: #{regression_network_forward.1}
  #allocation0 [shape = 'u32[]', space=smem, size = 0x4, offset = 0x4, fixed_abs, tag = 'smem constant byte address 0x4 - core index']
  #allocation1 [shape = 'u32[144,128]{1,0:T(1,128)}', space=vmem, size = 0x12000, scoped, tag = 'internal scratch']
  #allocation2 [shape = 'f32[1]{0:T(128)S(6)}', space=smem, size = 0x200, scoped, tag = 'scoped memory for regression_network_forward.1']
  %s0 = inlined_call_operand.vmem [shape: f32[200,16], index: 0, kind: input, shape index: {}]
  %s1 = inlined_call_operand.vmem [shape: f32[32,16], index: 1, kind: input, shape index: {}]
  %s2 = inlined_call_operand.vmem [shape: f32[32,1], index: 2, kind: input, shape index: {}]
  %s3 = inlined_call_operand.vmem [shape: f32[32,32], index: 3, kind: input, shape index: {}]
  %s4 = inlined_call_operand.vmem [shape: f32[32,1], index: 4, kind: input, shape index: {}]
  %s5 = inlined_call_operand.vmem [shape: f32[32,1], index: 5, kind: input, shape index: {}]
  %s6 = inlined_call_operand.<no memory space> [shape: f32[1], index: 6, kind: input, shape index: {}]
  %s7 = inlined_call_operand.hbm [shape: f32[1,200], index: 7, kind: output, shape index: {}]
  %s8 = sld [smem:[#allocation0]]
  $region61: #{regression_network_forward.1} parent=0
    _
  %s10 = ssub.s32 1, %s8
  %s11 = scalar_select 0, %s10, %s8
  %12 = sst [smem:[#allocation2]] %s6
  $region1: #{regression_network_forward.1} parent=0
    #allocation3 [shape = 'u8[1024]{0}', space=vmem, size = 0x400, scoped, tag = 'output window, operand 0']
    #allocation4 [shape = 's32[2]{0}', space=sflag, size = 0x8, scoped, tag = 'scoped memory for regression_network_forward.1']
    %13 = vsyncpa [#allocation4], 0
    %s14 = scalar_lea.sflag [#allocation4], 1
    %15 = vsyncpa %s14, 0
    loop: start=0, step=1, limit=4
    $region2: #{regression_network_forward.1} parent=1 // loop_pre_header
      _
    $region3: #{regression_network_forward.1} parent=1 // loop_header
      %s17 = sphi 0, %s21
      %p18 = scmp.ge.s32.totalorder %s17, 4
      %s27 = sphi 0, %s29
      %s30 = sphi 0, %s27
      %s31 = sphi 0, %s30
      %s47 = sphi 0, %s31
      %s51 = sphi 0, %s51
      %s53 = sphi 0, %s51
      %s54 = sphi 0, %s53
      %s68 = sphi 0, %s54
      %s72 = sphi 0, %s72
      %s74 = sphi 0, %s72
      %s75 = sphi 0, %s74
      %s89 = sphi 0, %s75
      %s93 = sphi 0, %s93
      %s95 = sphi 0, %s93
      %s96 = sphi 0, %s95
      %s110 = sphi 0, %s96
      %s114 = sphi 0, %s114
      %s116 = sphi 0, %s114
      %s117 = sphi 0, %s116
      %s131 = sphi 0, %s117
      %s135 = sphi 0, %s135
      %s137 = sphi 0, %s135
      %s138 = sphi 0, %s137
      %s152 = sphi 0, %s138
      %s156 = sphi 0, %s156
      %s158 = sphi 0, %s156
      %s159 = sphi 0, %s158
      %s173 = sphi 0, %s159
      %s179 = sphi 0, %s181
      %s182 = sphi 0, %s179
      %s183 = sphi 0, %s182
      %s199 = sphi 0, %s183
    $region4: #{regression_network_forward.1} parent=1 // loop_header_branch
      %20 = sbr.rel (%p18) target = $region8
    $region5: #{regression_network_forward.1} parent=1 // loop_body
      %s22 = ssub.s32 %s17, 1
      %s23 = ssub.s32 %s17, 2
      %s24 = sadd.s32 %s17, 1
      %s25 = ssub.s32 %s17, %s24
      %p26 = scmp.eq.s32.totalorder %s25, 0
      %s28 = sadd.s32 %s27, 1
      %s29 = scalar_select %p26, %s27, %s28
      %p32 = pneg %p26
      %p33 = scmp.eq.s32.totalorder %s17, 1
      %p34 = por %p32, %p33
      %p35 = scmp.ne.s32.totalorder %s27, %s30
      %p36 = scmp.eq.s32.totalorder %s17, 0
      %p37 = por %p35, %p36
      %p38 = scmp.ne.s32.totalorder %s27, %s30
      %p39 = scmp.eq.s32.totalorder %s22, 1
      %p40 = por %p38, %p39
      %p41 = scmp.ne.s32.totalorder %s30, %s31
      %p42 = scmp.eq.s32.totalorder %s22, 0
      %p43 = por %p41, %p42
      %p44 = scmp.ne.s32.totalorder %s30, %s31
      %p45 = scmp.eq.s32.totalorder %s23, 1
      %p46 = por %p44, %p45
      %p48 = scmp.ne.s32.totalorder %s31, %s47
      %p49 = scmp.eq.s32.totalorder %s23, 0
      %p50 = por %p48, %p49
      %s52 = sadd.s32 %s51, 1
      %p55 = scmp.eq.s32.totalorder %s17, 1
      %p56 = scmp.ne.s32.totalorder %s51, %s53
      %p57 = scmp.eq.s32.totalorder %s17, 0
      %p58 = por %p56, %p57
      %p59 = scmp.ne.s32.totalorder %s51, %s53
      %p60 = scmp.eq.s32.totalorder %s22, 1
      %p61 = por %p59, %p60
      %p62 = scmp.ne.s32.totalorder %s53, %s54
      %p63 = scmp.eq.s32.totalorder %s22, 0
      %p64 = por %p62, %p63
      %p65 = scmp.ne.s32.totalorder %s53, %s54
      %p66 = scmp.eq.s32.totalorder %s23, 1
      %p67 = por %p65, %p66
      %p69 = scmp.ne.s32.totalorder %s54, %s68
      %p70 = scmp.eq.s32.totalorder %s23, 0
      %p71 = por %p69, %p70
      %s73 = sadd.s32 %s72, 1
      %p76 = scmp.eq.s32.totalorder %s17, 1
      %p77 = scmp.ne.s32.totalorder %s72, %s74
      %p78 = scmp.eq.s32.totalorder %s17, 0
      %p79 = por %p77, %p78
      %p80 = scmp.ne.s32.totalorder %s72, %s74
      %p81 = scmp.eq.s32.totalorder %s22, 1
      %p82 = por %p80, %p81
      %p83 = scmp.ne.s32.totalorder %s74, %s75
      %p84 = scmp.eq.s32.totalorder %s22, 0
      %p85 = por %p83, %p84
      %p86 = scmp.ne.s32.totalorder %s74, %s75
      %p87 = scmp.eq.s32.totalorder %s23, 1
      %p88 = por %p86, %p87
      %p90 = scmp.ne.s32.totalorder %s75, %s89
      %p91 = scmp.eq.s32.totalorder %s23, 0
      %p92 = por %p90, %p91
      %s94 = sadd.s32 %s93, 1
      %p97 = scmp.eq.s32.totalorder %s17, 1
      %p98 = scmp.ne.s32.totalorder %s93, %s95
      %p99 = scmp.eq.s32.totalorder %s17, 0
      %p100 = por %p98, %p99
      %p101 = scmp.ne.s32.totalorder %s93, %s95
      %p102 = scmp.eq.s32.totalorder %s22, 1
      %p103 = por %p101, %p102
      %p104 = scmp.ne.s32.totalorder %s95, %s96
      %p105 = scmp.eq.s32.totalorder %s22, 0
      %p106 = por %p104, %p105
      %p107 = scmp.ne.s32.totalorder %s95, %s96
      %p108 = scmp.eq.s32.totalorder %s23, 1
      %p109 = por %p107, %p108
      %p111 = scmp.ne.s32.totalorder %s96, %s110
      %p112 = scmp.eq.s32.totalorder %s23, 0
      %p113 = por %p111, %p112
      %s115 = sadd.s32 %s114, 1
      %p118 = scmp.eq.s32.totalorder %s17, 1
      %p119 = scmp.ne.s32.totalorder %s114, %s116
      %p120 = scmp.eq.s32.totalorder %s17, 0
      %p121 = por %p119, %p120
      %p122 = scmp.ne.s32.totalorder %s114, %s116
      %p123 = scmp.eq.s32.totalorder %s22, 1
      %p124 = por %p122, %p123
      %p125 = scmp.ne.s32.totalorder %s116, %s117
      %p126 = scmp.eq.s32.totalorder %s22, 0
      %p127 = por %p125, %p126
      %p128 = scmp.ne.s32.totalorder %s116, %s117
      %p129 = scmp.eq.s32.totalorder %s23, 1
      %p130 = por %p128, %p129
      %p132 = scmp.ne.s32.totalorder %s117, %s131
      %p133 = scmp.eq.s32.totalorder %s23, 0
      %p134 = por %p132, %p133
      %s136 = sadd.s32 %s135, 1
      %p139 = scmp.eq.s32.totalorder %s17, 1
      %p140 = scmp.ne.s32.totalorder %s135, %s137
      %p141 = scmp.eq.s32.totalorder %s17, 0
      %p142 = por %p140, %p141
      %p143 = scmp.ne.s32.totalorder %s135, %s137
      %p144 = scmp.eq.s32.totalorder %s22, 1
      %p145 = por %p143, %p144
      %p146 = scmp.ne.s32.totalorder %s137, %s138
      %p147 = scmp.eq.s32.totalorder %s22, 0
      %p148 = por %p146, %p147
      %p149 = scmp.ne.s32.totalorder %s137, %s138
      %p150 = scmp.eq.s32.totalorder %s23, 1
      %p151 = por %p149, %p150
      %p153 = scmp.ne.s32.totalorder %s138, %s152
      %p154 = scmp.eq.s32.totalorder %s23, 0
      %p155 = por %p153, %p154
      %s157 = sadd.s32 %s156, 1
      %p160 = scmp.eq.s32.totalorder %s17, 1
      %p161 = scmp.ne.s32.totalorder %s156, %s158
      %p162 = scmp.eq.s32.totalorder %s17, 0
      %p163 = por %p161, %p162
      %p164 = scmp.ne.s32.totalorder %s156, %s158
      %p165 = scmp.eq.s32.totalorder %s22, 1
      %p166 = por %p164, %p165
      %p167 = scmp.ne.s32.totalorder %s158, %s159
      %p168 = scmp.eq.s32.totalorder %s22, 0
      %p169 = por %p167, %p168
      %p170 = scmp.ne.s32.totalorder %s158, %s159
      %p171 = scmp.eq.s32.totalorder %s23, 1
      %p172 = por %p170, %p171
      %p174 = scmp.ne.s32.totalorder %s159, %s173
      %p175 = scmp.eq.s32.totalorder %s23, 0
      %p176 = por %p174, %p175
      %s177 = ssub.s32 %s17, %s24
      %p178 = scmp.eq.s32.totalorder %s177, 0
      %s180 = sadd.s32 %s179, 1
      %s181 = scalar_select %p178, %s179, %s180
      %p184 = pneg %p178
      %p185 = scmp.eq.s32.totalorder %s17, 1
      %p186 = por %p184, %p185
      %p187 = scmp.ne.s32.totalorder %s179, %s182
      %p188 = scmp.eq.s32.totalorder %s17, 0
      %p189 = por %p187, %p188
      %p190 = scmp.ne.s32.totalorder %s179, %s182
      %p191 = scmp.eq.s32.totalorder %s22, 1
      %p192 = por %p190, %p191
      %p193 = scmp.ne.s32.totalorder %s182, %s183
      %p194 = scmp.eq.s32.totalorder %s22, 0
      %p195 = por %p193, %p194
      %p196 = scmp.ne.s32.totalorder %s182, %s183
      %p197 = scmp.eq.s32.totalorder %s23, 1
      %p198 = por %p196, %p197
      %p200 = scmp.ne.s32.totalorder %s183, %s199
      %p201 = scmp.eq.s32.totalorder %s23, 0
      %p202 = por %p200, %p201
      %p203 = scmp.le.s32.totalorder 1, %s17
      %p204 = scmp.lt.s32.totalorder %s17, 3
      %p205 = pnand %p203, %p204
      %p206 = pneg %p205
      // Predicated region
      $region9: #{regression_network_forward.1} parent=5 // pred_check
        _
      $region10: #{regression_network_forward.1} parent=5 // pred_check_branch
        %208 = sbr.rel (%p205) target = $region12
      $region11: #{regression_network_forward.1} parent=5 // pred_region
        %s209 = ssub.s32 %s17, 1
        // Predicated region
        $region13: #{regression_network_forward.1} parent=11 // pred_check
          %p210 = pneg %p64
        $region14: #{regression_network_forward.1} parent=11 // pred_check_branch
          %212 = sbr.rel (%p210) target = $region16
        $region15: #{regression_network_forward.1} parent=11 // pred_region
          _
        $region16: #{regression_network_forward.1} parent=11 // pred_fallthru
          _
        // Predicated region
        $region17: #{regression_network_forward.1} parent=11 // pred_check
          %p213 = pneg %p85
        $region18: #{regression_network_forward.1} parent=11 // pred_check_branch
          %215 = sbr.rel (%p213) target = $region20
        $region19: #{regression_network_forward.1} parent=11 // pred_region
          _
        $region20: #{regression_network_forward.1} parent=11 // pred_fallthru
          _
        // Predicated region
        $region21: #{regression_network_forward.1} parent=11 // pred_check
          %p216 = pneg %p106
        $region22: #{regression_network_forward.1} parent=11 // pred_check_branch
          %218 = sbr.rel (%p216) target = $region24
        $region23: #{regression_network_forward.1} parent=11 // pred_region
          _
        $region24: #{regression_network_forward.1} parent=11 // pred_fallthru
          _
        // Predicated region
        $region25: #{regression_network_forward.1} parent=11 // pred_check
          %p219 = pneg %p127
        $region26: #{regression_network_forward.1} parent=11 // pred_check_branch
          %221 = sbr.rel (%p219) target = $region28
        $region27: #{regression_network_forward.1} parent=11 // pred_region
          _
        $region28: #{regression_network_forward.1} parent=11 // pred_fallthru
          _
        // Predicated region
        $region29: #{regression_network_forward.1} parent=11 // pred_check
          %p222 = pneg %p148
        $region30: #{regression_network_forward.1} parent=11 // pred_check_branch
          %224 = sbr.rel (%p222) target = $region32
        $region31: #{regression_network_forward.1} parent=11 // pred_region
          _
        $region32: #{regression_network_forward.1} parent=11 // pred_fallthru
          _
        // Predicated region
        $region33: #{regression_network_forward.1} parent=11 // pred_check
          %p225 = pneg %p169
        $region34: #{regression_network_forward.1} parent=11 // pred_check_branch
          %227 = sbr.rel (%p225) target = $region36
        $region35: #{regression_network_forward.1} parent=11 // pred_region
          _
        $region36: #{regression_network_forward.1} parent=11 // pred_fallthru
          _
      $region12: #{regression_network_forward.1} parent=5 // pred_fallthru
        _
      %p228 = scmp.lt.s32.totalorder %s17, 2
      // Predicated region
      $region37: #{regression_network_forward.1} parent=5 // pred_check
        %p229 = pneg %p228
      $region38: #{regression_network_forward.1} parent=5 // pred_check_branch
        %231 = sbr.rel (%p229) target = $region40
      $region39: #{regression_network_forward.1} parent=5 // pred_region
        // Predicated region
        $region41: #{regression_network_forward.1} parent=39 // pred_check
          %p232 = pneg %p37
        $region42: #{regression_network_forward.1} parent=39 // pred_check_branch
          %234 = sbr.rel (%p232) target = $region44
        $region43: #{regression_network_forward.1} parent=39 // pred_region
          %s235 = smul.u32 16, %s17
          %s236 = ssub.s32 25, %s235
          %p237 = scmp.lt.s32.totalorder %s236, 16
          %s238 = scalar_select %p237, %s236, 16
          %s239 = smul.u32 128, %s238
          %p240 = scmp.lt.s32.totalorder %s235, 24
          %s241 = scalar_select %p240, %s235, 24
          %s242 = smul.addr %s241, 8
          %s243 = scalar_lea.vmem %s0, %s242
          %s244 = smul.u32 16, %s17
          %s245 = ssub.s32 25, %s244
          %p246 = scmp.lt.s32.totalorder %s245, 16
          %s247 = scalar_select %p246, %s245, 16
          %s248 = smul.u32 128, %s247
        $region44: #{regression_network_forward.1} parent=39 // pred_fallthru
          _
      $region40: #{regression_network_forward.1} parent=5 // pred_fallthru
        _
      %p249 = scmp.le.s32.totalorder 1, %s17
      %p250 = scmp.lt.s32.totalorder %s17, 3
      %p251 = pnand %p249, %p250
      %p252 = pneg %p251
      // Predicated region
      $region45: #{regression_network_forward.1} parent=5 // pred_check
        _
      $region46: #{regression_network_forward.1} parent=5 // pred_check_branch
        %254 = sbr.rel (%p251) target = $region48
      $region47: #{regression_network_forward.1} parent=5 // pred_region
        %s255 = ssub.s32 %s17, 1
        %s256 = smul.u32 16, %s22
        %s257 = ssub.s32 25, %s256
        %p258 = scmp.lt.s32.totalorder %s257, 16
        %s259 = scalar_select %p258, %s257, 16
        %s260 = smul.u32 128, %s259
        %p261 = scmp.lt.s32.totalorder %s256, 24
        %s262 = scalar_select %p261, %s256, 24
        %s263 = smul.addr %s262, 8
        %s264 = scalar_lea.vmem %s0, %s263
        %p265 = pneg %p43
        %p266 = pneg %p40
        %p267 = pneg %p64
        %p268 = pneg %p61
        %p269 = pneg %p85
        %p270 = pneg %p82
        %p271 = pneg %p106
        %p272 = pneg %p103
        %p273 = pneg %p127
        %p274 = pneg %p124
        %p275 = pneg %p148
        %p276 = pneg %p145
        %p277 = pneg %p169
        %p278 = pneg %p166
        %p279 = pneg %p195
        %p280 = pneg %p192
        %s281 = sand.u32 %s182, 1
        %s282 = scalar_lea.sflag [#allocation4], %s281
        %s283 = sand.u32 %s182, 1
        %s284 = scalar_lea.vmem [#allocation3], %s283
        %s285 = smul.u32 16, %s22
        %s286 = ssub.s32 25, %s285
        %p287 = scmp.lt.s32.totalorder %s286, 16
        %s288 = scalar_select %p287, %s286, 16
        %s289 = smul.u32 128, %s288
        %p290 = scmp.lt.s32.totalorder %s285, 24
        %s291 = scalar_select %p290, %s285, 24
        %s292 = smul.addr %s291, 8
        %s293 = scalar_lea.vmem %s0, %s292
        %s294 = smul.u32 16, %s22
        %s295 = ssub.s32 25, %s294
        %p296 = scmp.lt.s32.totalorder %s295, 16
        %s297 = scalar_select %p296, %s295, 16
        %s298 = smul.u32 128, %s297
        %v299 = vld [vmem:[%s1] sm:$0xff]
        %v300 = vld [vmem:[%s1 + $0x8] sm:$0xff]
        %v301 = vld [vmem:[%s1 + $0x10] sm:$0xff]
        %v302 = vld [vmem:[%s1 + $0x18] sm:$0xff]
        %v303 = vld [vmem:[%s293] sm:$0xff]
        %v304 = vld [vmem:[%s293 + $0x8] sm:$0xff]
        %v305 = vld [vmem:[%s293 + $0x10] sm:$0xff]
        %v306 = vld [vmem:[%s293 + $0x18] sm:$0xff]
        %v307 = vld [vmem:[%s293 + $0x20] sm:$0xff]
        %v308 = vld [vmem:[%s293 + $0x28] sm:$0xff]
        %v309 = vld [vmem:[%s293 + $0x30] sm:$0xff]
        %v310 = vld [vmem:[%s293 + $0x38] sm:$0xff]
        %v311 = vld [vmem:[%s293 + $0x40] sm:$0xff]
        %v312 = vld [vmem:[%s293 + $0x48] sm:$0xff]
        %v313 = vld [vmem:[%s293 + $0x50] sm:$0xff]
        %v314 = vld [vmem:[%s293 + $0x58] sm:$0xff]
        %v315 = vld [vmem:[%s293 + $0x60] sm:$0xff]
        %v316 = vld [vmem:[%s293 + $0x68] sm:$0xff]
        %v317 = vld [vmem:[%s293 + $0x70] sm:$0xff]
        %v318 = vld [vmem:[%s293 + $0x78] sm:$0xff]
        %v319 = vld [vmem:[%s2] sm:$0xff]
        %v320 = vld [vmem:[%s2 + $0x8] sm:$0xff]
        %v321 = vld [vmem:[%s2 + $0x10] sm:$0xff]
        %v322 = vld [vmem:[%s2 + $0x18] sm:$0xff]
        %324 = vset.pattern.permute.xlu0 0
        %325 = vperm.xlu0 %324, %v319
        %v326 = vpop.permute.xlu0 %325
        %329 = vset.pattern.permute.xlu0 0
        %330 = vperm.xlu0 %329, %v320
        %v331 = vpop.permute.xlu0 %330
        %334 = vset.pattern.permute.xlu0 0
        %335 = vperm.xlu0 %334, %v321
        %v336 = vpop.permute.xlu0 %335
        %339 = vset.pattern.permute.xlu0 0
        %340 = vperm.xlu0 %339, %v322
        %v341 = vpop.permute.xlu0 %340
        %vm343 = vcmask 130048
        %v345 = vsel %vm343, %v299, 0
        %v348 = vsel %vm343, %v300, 0
        %v351 = vsel %vm343, %v301, 0
        %v354 = vsel %vm343, %v302, 0
        %v357 = vsel %vm343, %v303, 0
        %v360 = vsel %vm343, %v304, 0
        %v363 = vsel %vm343, %v305, 0
        %v366 = vsel %vm343, %v306, 0
        %v369 = vsel %vm343, %v307, 0
        %v372 = vsel %vm343, %v308, 0
        %v375 = vsel %vm343, %v309, 0
        %v378 = vsel %vm343, %v310, 0
        %v381 = vsel %vm343, %v311, 0
        %v384 = vsel %vm343, %v312, 0
        %v387 = vsel %vm343, %v313, 0
        %v390 = vsel %vm343, %v314, 0
        %v393 = vsel %vm343, %v315, 0
        %v396 = vsel %vm343, %v316, 0
        %v399 = vsel %vm343, %v317, 0
        %v402 = vsel %vm343, %v318, 0
        %404 = vmatprep.subr.mxu0 0.0
        %405 = vmatpush1.xpose.msra.mxu0 %v357
        %406 = vmatprep.subr.mxu0 0.0
        %407 = vmatpush1.xpose.msra.mxu0 %v360
        %408 = vmatprep.subr.mxu0 0.0
        %409 = vmatpush1.xpose.msra.mxu0 %v363
        %410 = vmatprep.subr.mxu0 0.0
        %411 = vmatpush1.xpose.msra.mxu0 %v366
        %412 = vmatprep.subr.mxu0 0.0
        %413 = vmatpush1.xpose.msra.mxu0 %v369
        %414 = vmatprep.subr.mxu0 0.0
        %415 = vmatpush1.xpose.msra.mxu0 %v372
        %416 = vmatprep.subr.mxu0 0.0
        %417 = vmatpush1.xpose.msra.mxu0 %v375
        %418 = vmatprep.subr.mxu0 0.0
        %419 = vmatpush1.xpose.msra.mxu0 %v378
        %420 = vmatprep.subr.mxu0 0.0
        %421 = vmatpush1.xpose.msra.mxu0 %v381
        %422 = vmatprep.subr.mxu0 0.0
        %423 = vmatpush1.xpose.msra.mxu0 %v384
        %424 = vmatprep.subr.mxu0 0.0
        %425 = vmatpush1.xpose.msra.mxu0 %v387
        %426 = vmatprep.subr.mxu0 0.0
        %427 = vmatpush1.xpose.msra.mxu0 %v390
        %428 = vmatprep.subr.mxu0 0.0
        %429 = vmatpush1.xpose.msra.mxu0 %v393
        %430 = vmatprep.subr.mxu0 0.0
        %431 = vmatpush1.xpose.msra.mxu0 %v396
        %432 = vmatprep.subr.mxu0 0.0
        %433 = vmatpush1.xpose.msra.mxu0 %v399
        %434 = vmatprep.subr.mxu0 0.0
        %435 = vmatpush1.xpose.msra.mxu0 %v402
        %436 = vmatprep.subr.mxu0 0.0
        %437 = vmatpush1.xpose.msra.mxu0 0.0
        %438 = vmatprep.subr.mxu0 0.0
        %439 = vmatpush1.xpose.msra.mxu0 0.0
        %440 = vmatprep.subr.mxu0 0.0
        %441 = vmatpush1.xpose.msra.mxu0 0.0
        %442 = vmatprep.subr.mxu0 0.0
        %443 = vmatpush1.xpose.msra.mxu0 0.0
        %444 = vmatprep.subr.mxu0 0.0
        %445 = vmatpush1.xpose.msra.mxu0 0.0
        %446 = vmatprep.subr.mxu0 0.0
        %447 = vmatpush1.xpose.msra.mxu0 0.0
        %448 = vmatprep.subr.mxu0 0.0
        %449 = vmatpush1.xpose.msra.mxu0 0.0
        %450 = vmatprep.subr.mxu0 0.0
        %451 = vmatpush1.xpose.msra.mxu0 0.0
        %452 = vmatprep.subr.mxu0 0.0
        %453 = vmatpush1.xpose.msra.mxu0 0.0
        %454 = vmatprep.subr.mxu0 0.0
        %455 = vmatpush1.xpose.msra.mxu0 0.0
        %456 = vmatprep.subr.mxu0 0.0
        %457 = vmatpush1.xpose.msra.mxu0 0.0
        %458 = vmatprep.subr.mxu0 0.0
        %459 = vmatpush1.xpose.msra.mxu0 0.0
        %460 = vmatprep.subr.mxu0 0.0
        %461 = vmatpush1.xpose.msra.mxu0 0.0
        %462 = vmatprep.subr.mxu0 0.0
        %463 = vmatpush1.xpose.msra.mxu0 0.0
        %464 = vmatprep.subr.mxu0 0.0
        %465 = vmatpush1.xpose.msra.mxu0 0.0
        %466 = vmatprep.subr.mxu0 0.0
        %467 = vmatpush1.xpose.msra.mxu0 0.0
        %468 = vmatprep.mubr.f32.mxu0 0.0
        %469 = vmatmul.mubr.f32.gmra.mrb[0].mxu0 %v345
        %v470 = vpop.f32.mrb[0].mxu0
        %v471 = vadd.f32 %v326, %v470
        %v472 = vpop.f32.mrb[0].mxu0
        %473 = vmatprep.mubr.f32.mxu0 0.0
        %474 = vmatmul.mubr.f32.gmra.mrb[0].mxu0 %v348
        %v475 = vpop.f32.mrb[0].mxu0
        %v476 = vadd.f32 %v331, %v475
        %v477 = vpop.f32.mrb[0].mxu0
        %478 = vmatprep.mubr.f32.mxu0 0.0
        %479 = vmatmul.mubr.f32.gmra.mrb[0].mxu0 %v351
        %v480 = vpop.f32.mrb[0].mxu0
        %v481 = vadd.f32 %v336, %v480
        %v482 = vpop.f32.mrb[0].mxu0
        %483 = vmatprep.mubr.f32.mxu0 0.0
        %484 = vmatmul.mubr.f32.gmra.mrb[0].mxu0 %v354
        %v485 = vpop.f32.mrb[0].mxu0
        %v486 = vadd.f32 %v341, %v485
        %v487 = vpop.f32.mrb[0].mxu0
        %488 = vdwg.mxu0
        %v489 = vmul.f32 %v471, 0.5
        %v490 = vmul.f32 %v476, 0.5
        %v491 = vmul.f32 %v481, 0.5
        %v492 = vmul.f32 %v486, 0.5
        %v493 = vmul.f32 %v471, 0.70710677
        %v494 = vmul.f32 %v476, 0.70710677
        %v495 = vmul.f32 %v481, 0.70710677
        %v496 = vmul.f32 %v486, 0.70710677
        %v497 = verf.f32.pop %v493
        %v498 = verf.f32.pop %v494
        %v499 = verf.f32.pop %v495
        %v500 = verf.f32.pop %v496
        %v501 = vadd.f32 %v497, 1.0
        %v502 = vadd.f32 %v498, 1.0
        %v503 = vadd.f32 %v499, 1.0
        %v504 = vadd.f32 %v500, 1.0
        %v505 = vmul.f32 %v489, %v501
        %v506 = vmul.f32 %v490, %v502
        %v507 = vmul.f32 %v491, %v503
        %v508 = vmul.f32 %v492, %v504
        %v509 = vld [vmem:[%s3] sm:$0xff]
        %v510 = vld [vmem:[%s3 + $0x8] sm:$0xff]
        %v511 = vld [vmem:[%s3 + $0x10] sm:$0xff]
        %v512 = vld [vmem:[%s3 + $0x18] sm:$0xff]
        %v513 = vld [vmem:[%s4] sm:$0xff]
        %v514 = vld [vmem:[%s4 + $0x8] sm:$0xff]
        %v515 = vld [vmem:[%s4 + $0x10] sm:$0xff]
        %v516 = vld [vmem:[%s4 + $0x18] sm:$0xff]
        %518 = vset.pattern.permute.xlu0 0
        %519 = vperm.xlu0 %518, %v513
        %v520 = vpop.permute.xlu0 %519
        %523 = vset.pattern.permute.xlu0 0
        %524 = vperm.xlu0 %523, %v514
        %v525 = vpop.permute.xlu0 %524
        %528 = vset.pattern.permute.xlu0 0
        %529 = vperm.xlu0 %528, %v515
        %v530 = vpop.permute.xlu0 %529
        %533 = vset.pattern.permute.xlu0 0
        %534 = vperm.xlu0 %533, %v516
        %v535 = vpop.permute.xlu0 %534
        %vm537 = vcmask 261120
        %v539 = vsel %vm537, %v509, 0
        %v542 = vsel %vm537, %v510, 0
        %v545 = vsel %vm537, %v511, 0
        %v548 = vsel %vm537, %v512, 0
        %550 = vmatprep.subr.mxu0 0.0
        %551 = vmatpush1.msra.mxu0 %v505
        %552 = vmatprep.subr.mxu0 0.0
        %553 = vmatpush1.msra.mxu0 %v506
        %554 = vmatprep.subr.mxu0 0.0
        %555 = vmatpush1.msra.mxu0 %v507
        %556 = vmatprep.subr.mxu0 0.0
        %557 = vmatpush1.msra.mxu0 %v508
        %558 = vmatprep.subr.mxu0 0.0
        %559 = vmatpush1.msra.mxu0 0.0
        %560 = vmatprep.subr.mxu0 0.0
        %561 = vmatpush1.msra.mxu0 0.0
        %562 = vmatprep.subr.mxu0 0.0
        %563 = vmatpush1.msra.mxu0 0.0
        %564 = vmatprep.subr.mxu0 0.0
        %565 = vmatpush1.msra.mxu0 0.0
        %566 = vmatprep.subr.mxu0 0.0
        %567 = vmatpush1.msra.mxu0 0.0
        %568 = vmatprep.subr.mxu0 0.0
        %569 = vmatpush1.msra.mxu0 0.0
        %570 = vmatprep.subr.mxu0 0.0
        %571 = vmatpush1.msra.mxu0 0.0
        %572 = vmatprep.subr.mxu0 0.0
        %573 = vmatpush1.msra.mxu0 0.0
        %574 = vmatprep.subr.mxu0 0.0
        %575 = vmatpush1.msra.mxu0 0.0
        %576 = vmatprep.subr.mxu0 0.0
        %577 = vmatpush1.msra.mxu0 0.0
        %578 = vmatprep.subr.mxu0 0.0
        %579 = vmatpush1.msra.mxu0 0.0
        %580 = vmatprep.subr.mxu0 0.0
        %581 = vmatpush1.msra.mxu0 0.0
        %582 = vmatprep.subr.mxu0 0.0
        %583 = vmatpush1.msra.mxu0 0.0
        %584 = vmatprep.subr.mxu0 0.0
        %585 = vmatpush1.msra.mxu0 0.0
        %586 = vmatprep.subr.mxu0 0.0
        %587 = vmatpush1.msra.mxu0 0.0
        %588 = vmatprep.subr.mxu0 0.0
        %589 = vmatpush1.msra.mxu0 0.0
        %590 = vmatprep.subr.mxu0 0.0
        %591 = vmatpush1.msra.mxu0 0.0
        %592 = vmatprep.subr.mxu0 0.0
        %593 = vmatpush1.msra.mxu0 0.0
        %594 = vmatprep.subr.mxu0 0.0
        %595 = vmatpush1.msra.mxu0 0.0
        %596 = vmatprep.subr.mxu0 0.0
        %597 = vmatpush1.msra.mxu0 0.0
        %598 = vmatprep.subr.mxu0 0.0
        %599 = vmatpush1.msra.mxu0 0.0
        %600 = vmatprep.subr.mxu0 0.0
        %601 = vmatpush1.msra.mxu0 0.0
        %602 = vmatprep.subr.mxu0 0.0
        %603 = vmatpush1.msra.mxu0 0.0
        %604 = vmatprep.subr.mxu0 0.0
        %605 = vmatpush1.msra.mxu0 0.0
        %606 = vmatprep.subr.mxu0 0.0
        %607 = vmatpush1.msra.mxu0 0.0
        %608 = vmatprep.subr.mxu0 0.0
        %609 = vmatpush1.msra.mxu0 0.0
        %610 = vmatprep.subr.mxu0 0.0
        %611 = vmatpush1.msra.mxu0 0.0
        %612 = vmatprep.subr.mxu0 0.0
        %613 = vmatpush1.msra.mxu0 0.0
        %614 = vmatprep.mubr.f32.mxu0 0.0
        %615 = vmatmul.mubr.f32.gmra.mrb[0].mxu0 %v539
        %v616 = vpop.f32.mrb[0].mxu0
        %v617 = vadd.f32 %v520, %v616
        %v618 = vpop.f32.mrb[0].mxu0
        %619 = vmatprep.mubr.f32.mxu0 0.0
        %620 = vmatmul.mubr.f32.gmra.mrb[0].mxu0 %v542
        %v621 = vpop.f32.mrb[0].mxu0
        %v622 = vadd.f32 %v525, %v621
        %v623 = vpop.f32.mrb[0].mxu0
        %624 = vmatprep.mubr.f32.mxu0 0.0
        %625 = vmatmul.mubr.f32.gmra.mrb[0].mxu0 %v545
        %v626 = vpop.f32.mrb[0].mxu0
        %v627 = vadd.f32 %v530, %v626
        %v628 = vpop.f32.mrb[0].mxu0
        %629 = vmatprep.mubr.f32.mxu0 0.0
        %630 = vmatmul.mubr.f32.gmra.mrb[0].mxu0 %v548
        %v631 = vpop.f32.mrb[0].mxu0
        %v632 = vadd.f32 %v535, %v631
        %v633 = vpop.f32.mrb[0].mxu0
        %634 = vdwg.mxu0
        %v635 = vmul.f32 %v617, 0.5
        %v636 = vmul.f32 %v622, 0.5
        %v637 = vmul.f32 %v627, 0.5
        %v638 = vmul.f32 %v632, 0.5
        %v639 = vmul.f32 %v617, 0.70710677
        %v640 = vmul.f32 %v622, 0.70710677
        %v641 = vmul.f32 %v627, 0.70710677
        %v642 = vmul.f32 %v632, 0.70710677
        %v643 = verf.f32.pop %v639
        %v644 = verf.f32.pop %v640
        %v645 = verf.f32.pop %v641
        %v646 = verf.f32.pop %v642
        %v647 = vadd.f32 %v643, 1.0
        %v648 = vadd.f32 %v644, 1.0
        %v649 = vadd.f32 %v645, 1.0
        %v650 = vadd.f32 %v646, 1.0
        %v651 = vmul.f32 %v635, %v647
        %v652 = vmul.f32 %v636, %v648
        %v653 = vmul.f32 %v637, %v649
        %v654 = vmul.f32 %v638, %v650
        %v655 = vld [vmem:[%s5] sm:$0xff]
        %v656 = vld [vmem:[%s5 + $0x8] sm:$0xff]
        %v657 = vld [vmem:[%s5 + $0x10] sm:$0xff]
        %v658 = vld [vmem:[%s5 + $0x18] sm:$0xff]
        %660 = vset.pattern.permute.xlu0 0
        %661 = vperm.xlu0 %660, %v655
        %v662 = vpop.permute.xlu0 %661
        %665 = vset.pattern.permute.xlu0 0
        %666 = vperm.xlu0 %665, %v656
        %v667 = vpop.permute.xlu0 %666
        %670 = vset.pattern.permute.xlu0 0
        %671 = vperm.xlu0 %670, %v657
        %v672 = vpop.permute.xlu0 %671
        %675 = vset.pattern.permute.xlu0 0
        %676 = vperm.xlu0 %675, %v658
        %v677 = vpop.permute.xlu0 %676
        %v679 = vmul.f32 %v651, %v662
        %v680 = vmul.f32 %v652, %v667
        %v681 = vmul.f32 %v653, %v672
        %v682 = vmul.f32 %v654, %v677
        %v683 = vadd.f32 %v679, %v680
        %v684 = vadd.f32 %v683, %v681
        %v685 = vadd.f32 %v684, %v682
        %v686 = vrot.slane %v685, 4
        %v687 = vadd.f32 %v685, %v686
        %v688 = vrot.slane %v687, 2
        %v689 = vadd.f32 %v687, %v688
        %v690 = vrot.slane %v689, 1
        %v691 = vadd.f32 %v689, %v690
        %s692 = sld [smem:[#allocation2]]
        %v693 = vstv %s692
        %v694 = vadd.f32 %v691, %v693
        %695 = vst [vmem:[%s284] sm:$0x1] %v694
        %s696 = sand.u32 %s182, 1
        %s697 = scalar_lea.sflag [#allocation4], %s696
        %s698 = sand.u32 %s182, 1
        %s699 = scalar_lea.vmem [#allocation3], %s698
        // Predicated region
        $region49: #{regression_network_forward.1} parent=47 // pred_check
          %p700 = pneg %p192
        $region50: #{regression_network_forward.1} parent=47 // pred_check_branch
          %702 = sbr.rel (%p700) target = $region52
        $region51: #{regression_network_forward.1} parent=47 // pred_region
          %s704 = ssub.s32 16, 16
          %705 = vsyncadd %s697, %s704
          %s706 = smul.addr %s22, 16
          %s707 = scalar_lea.hbm %s7, %s706
          %s709 = sshll.u32 %s699, 4
          %s710 = int_to_ptr.vmem [resolvable:$true] %s709
          %712 = dma.vmem_to_hbm [thread:$0]  %s710, 16, %s707, %s697
        $region52: #{regression_network_forward.1} parent=47 // pred_fallthru
          _
      $region48: #{regression_network_forward.1} parent=5 // pred_fallthru
        _
      %p713 = scmp.le.s32.totalorder 2, %s17
      // Predicated region
      $region53: #{regression_network_forward.1} parent=5 // pred_check
        %p714 = pneg %p713
      $region54: #{regression_network_forward.1} parent=5 // pred_check_branch
        %716 = sbr.rel (%p714) target = $region56
      $region55: #{regression_network_forward.1} parent=5 // pred_region
        %s717 = ssub.s32 %s17, 2
        // Predicated region
        $region57: #{regression_network_forward.1} parent=55 // pred_check
          %p718 = pneg %p198
        $region58: #{regression_network_forward.1} parent=55 // pred_check_branch
          %720 = sbr.rel (%p718) target = $region60
        $region59: #{regression_network_forward.1} parent=55 // pred_region
          %s721 = sand.u32 %s183, 1
          %s722 = scalar_lea.sflag [#allocation4], %s721
          %s723 = sand.u32 %s183, 1
          %s724 = scalar_lea.vmem [#allocation3], %s723
          %725 = dma.done %s722, 16
        $region60: #{regression_network_forward.1} parent=55 // pred_fallthru
          _
      $region56: #{regression_network_forward.1} parent=5 // pred_fallthru
        _
    $region6: #{regression_network_forward.1} parent=1 // loop_footer
      %s21 = sadd.s32 1, %s17
    $region7: #{regression_network_forward.1} parent=1 // loop_footer_branch
      %16 = sbr.rel target = $region3
    $region8: #{regression_network_forward.1} parent=1 // loop_exit
      _
    %726 = vsyncpa [#allocation4], 1
    %s727 = scalar_lea.sflag [#allocation4], 1
    %728 = vsyncpa %s727, 1

</llo_original>
